<compile_context>
chip_gen: v7x
topology: tpu7x:2x2x1
jax: 0.10.0
libtpu: 0.0.40
codegen_flags: <defaults>
</compile_context>

<pallas_src>
import functools

import jax
import jax.numpy as jnp
from jax.experimental import pallas as pl
from jax.experimental.pallas import tpu as pltpu


def se_kernel(x_ref, w1t_ref, w2t_ref, o_ref, *, channels_last):
    # x_ref/o_ref: (Bt, HW, C) if channels_last else (Bt, C, HW)
    # w1t_ref: (C, Cr)   w2t_ref: (Cr, C)   (already transposed + in matmul dtype)
    x = x_ref[...]                                            # native dtype

    # squeeze: global average pool over the spatial axis, f32 accumulation
    spatial_axis = 1 if channels_last else 2
    y = jnp.mean(x, axis=spatial_axis, dtype=jnp.float32)     # (Bt, C)

    # excite: fc1 (no bias) -> ReLU -> fc2 (no bias) -> sigmoid
    # row-vector matmuls against pre-transposed, pre-cast weights (lane-dense results)
    wdt = w1t_ref.dtype
    h = jnp.dot(y.astype(wdt), w1t_ref[...],
                preferred_element_type=jnp.float32)           # (Bt, Cr)
    h = jnp.maximum(h, 0.0)
    s = jnp.dot(h.astype(wdt), w2t_ref[...],
                preferred_element_type=jnp.float32)           # (Bt, C)
    s = jax.nn.sigmoid(s).astype(o_ref.dtype)

    # scale: per-channel gate broadcast over the spatial axis, native-dtype math
    if channels_last:
        o_ref[...] = x * s[:, None, :]
    else:
        o_ref[...] = x * s[:, :, None]


def _vmem_capacity_bytes():
    try:
        return int(pltpu.get_tpu_info().vmem_capacity_bytes)
    except Exception:
        return 64 << 20          # conservative default (v7x-sized VMEM)


def _min_grid_steps():
    # v7x shards a 'parallel' grid axis across its 2 TensorCores; keep >= 2 blocks
    # per core so each retains double-buffered DMA/compute overlap. v5e/v6e: 1 TC,
    # so no reason to shrink the block just to add grid steps.
    try:
        kind = jax.devices()[0].device_kind.lower()
    except Exception:
        return 2
    return 4 if "7" in kind else 1


def se_layer(x, w1, w2):
    """x: [B, C, H, W] NCHW. w1: [C//r, C], w2: [C, C//r] (torch nn.Linear layout)."""
    B, C, H, W = x.shape
    Cr = w1.shape[0]
    HW = H * W

    # Layout selection: keep a >=128-friendly axis lane-dense to avoid masked stores.
    channels_last = (HW % 128 != 0) and (C % 128 == 0)
    x2 = x.reshape(B, C, HW)
    if channels_last:
        x2 = jnp.transpose(x2, (0, 2, 1))                     # (B, HW, C): layout plumbing only

    # Pre-transpose + pre-cast weights once (hoisted out of the per-step gate chain).
    wdt = jnp.bfloat16 if x.dtype == jnp.bfloat16 else jnp.float32
    w1t = jnp.transpose(w1).astype(wdt)                       # (C, Cr)
    w2t = jnp.transpose(w2).astype(wdt)                       # (Cr, C)

    itemsize = jnp.dtype(x.dtype).itemsize
    per_item = C * HW * itemsize
    w_bytes = 2 * C * Cr * jnp.dtype(wdt).itemsize            # weights, single-buffered

    # VMEM budget: pipelined footprint ~= 2x in-block + 2x out-block + weights.
    vmem_cap = _vmem_capacity_bytes()                          # 128 MiB v5e/v6e, 64 MiB v7x
    budget = (vmem_cap * 3) // 4                               # headroom for compiler scratch
    block_target = max(budget - w_bytes, 1 << 20) // 4
    bt = max(1, min(B, block_target // max(per_item, 1)))
    min_steps = _min_grid_steps()
    if min_steps > 1 and B >= min_steps:
        bt = min(bt, pl.cdiv(B, min_steps))
    grid = (pl.cdiv(B, bt),)                                   # ragged last block allowed

    block_bytes = bt * per_item
    vmem_needed = 4 * block_bytes + w_bytes + (4 << 20)        # + slack for misc scratch
    vmem_limit = int(min(max(vmem_needed, budget), vmem_cap))

    blk = (bt, HW, C) if channels_last else (bt, C, HW)
    kernel = functools.partial(se_kernel, channels_last=channels_last)

    out = pl.pallas_call(
        kernel,
        out_shape=jax.ShapeDtypeStruct(x2.shape, x.dtype),
        grid_spec=pltpu.PrefetchScalarGridSpec(
            num_scalar_prefetch=0,
            grid=grid,
            in_specs=[
                pl.BlockSpec(blk, lambda b: (b, 0, 0)),
                # constant index map -> fetched once; single-buffered to save VMEM
                pl.BlockSpec((C, Cr), lambda b: (0, 0), pipeline_mode=pl.Buffered(1)),
                pl.BlockSpec((Cr, C), lambda b: (0, 0), pipeline_mode=pl.Buffered(1)),
            ],
            out_specs=pl.BlockSpec(blk, lambda b: (b, 0, 0)),
        ),
        compiler_params=pltpu.CompilerParams(
            dimension_semantics=("parallel",),
            vmem_limit_bytes=vmem_limit),
    )(x2, w1t, w2t)

    if channels_last:
        out = jnp.transpose(out, (0, 2, 1))
    return out.reshape(B, C, H, W)


def se_layer_ref(x, w1, w2):
    # pure-JAX reference matching the PyTorch forward
    y = jnp.mean(x.astype(jnp.float32), axis=(2, 3))            # (B, C)
    y = jnp.maximum(y @ w1.T.astype(jnp.float32), 0.0)          # (B, C//r)
    y = jax.nn.sigmoid(y @ w2.T.astype(jnp.float32))            # (B, C)
    return (x.astype(jnp.float32) * y[:, :, None, None]).astype(x.dtype)


if __name__ == "__main__":
    # --- primary check: small NCHW shape, f32, spatial lane-dense path (HW=256) ---
    B, C, H, W = 2, 4, 16, 16
    reduction = 1
    Cr = C // reduction
    kx, k1, k2 = jax.random.split(jax.random.PRNGKey(0), 3)
    x = jax.random.normal(kx, (B, C, H, W), dtype=jnp.float32)
    # nn.Linear(channel, channel//r, bias=False) stores weight as (out, in)
    w1 = jax.random.normal(k1, (Cr, C), dtype=jnp.float32) * (1.0 / jnp.sqrt(C))
    w2 = jax.random.normal(k2, (C, Cr), dtype=jnp.float32) * (1.0 / jnp.sqrt(Cr))

    out = jax.block_until_ready(se_layer(x, w1, w2))
    ref = se_layer_ref(x, w1, w2)
    assert out.shape == (B, C, H, W)
    assert jnp.allclose(out, ref, atol=1e-5, rtol=1e-5), "f32 mismatch vs reference"

    # --- secondary check: ResNet-late-stage-like shape, bf16, channel lane-dense path ---
    B2, C2, H2, W2 = 2, 128, 7, 7
    Cr2 = C2 // 4
    kx2, k12, k22 = jax.random.split(jax.random.PRNGKey(1), 3)
    xb = jax.random.normal(kx2, (B2, C2, H2, W2), dtype=jnp.float32).astype(jnp.bfloat16)
    w1b = (jax.random.normal(k12, (Cr2, C2), dtype=jnp.float32)
           * (1.0 / jnp.sqrt(C2))).astype(jnp.bfloat16)
    w2b = (jax.random.normal(k22, (C2, Cr2), dtype=jnp.float32)
           * (1.0 / jnp.sqrt(Cr2))).astype(jnp.bfloat16)

    outb = jax.block_until_ready(se_layer(xb, w1b, w2b))
    refb = se_layer_ref(xb, w1b, w2b)
    assert outb.shape == (B2, C2, H2, W2)
    assert jnp.allclose(outb.astype(jnp.float32), refb.astype(jnp.float32),
                        atol=5e-2, rtol=5e-2), "bf16 mismatch vs reference"

    print("KERNEL_OK")
</pallas_src>

<mosaic_0001>
module attributes {stable_mosaic.version = 11 : i64} {
  func.func @se_kernel(%arg0: i32, %arg1: memref<2x4x256xf32, #tpu.memory_space<vmem>>, %arg2: memref<4x4xf32, #tpu.memory_space<vmem>>, %arg3: memref<4x4xf32, #tpu.memory_space<vmem>>, %arg4: memref<2x4x256xf32, #tpu.memory_space<vmem>>) attributes {dimension_semantics = [#tpu.dimension_semantics<parallel>], iteration_bounds = array<i64: 1>, scalar_prefetch = 0 : i64, scratch_operands = 0 : i64, tpu.core_type = #tpu.core_type<tc>, window_params = [{transform_indices = @transform_0, window_bounds = array<i64: 2, 4, 256>}, {pipeline_mode = #tpu.pipeline_mode<synchronous>, transform_indices = @transform_1, window_bounds = array<i64: 4, 4>}, {pipeline_mode = #tpu.pipeline_mode<synchronous>, transform_indices = @transform_2, window_bounds = array<i64: 4, 4>}, {transform_indices = @transform_3, window_bounds = array<i64: 2, 4, 256>}]} {
    %c0 = arith.constant 0 : index
    %c0_0 = arith.constant 0 : index
    %c0_1 = arith.constant 0 : index
    %0 = vector.load %arg1[%c0, %c0_0, %c0_1] : memref<2x4x256xf32, #tpu.memory_space<vmem>>, vector<2x4x256xf32>
    %cst = arith.constant dense<0.000000e+00> : vector<2x4xf32>
    %1 = vector.multi_reduction <add>, %0, %cst [2] : vector<2x4x256xf32> to vector<2x4xf32>
    %cst_2 = arith.constant 2.560000e+02 : f32
    %2 = vector.broadcast %cst_2 : f32 to vector<2x4xf32>
    %3 = arith.divf %1, %2 : vector<2x4xf32>
    %c0_3 = arith.constant 0 : index
    %c0_4 = arith.constant 0 : index
    %4 = vector.load %arg2[%c0_3, %c0_4] : memref<4x4xf32, #tpu.memory_space<vmem>>, vector<4x4xf32>
    %cst_5 = arith.constant dense<0.000000e+00> : vector<2x4xf32>
    %5 = tpu.matmul %3, %4, %cst_5 {dimension_numbers = #tpu.dot_dimension_numbers<[1], [0], [0], [1], [0, 0, 1, 1], [], []>} : vector<2x4xf32>, vector<4x4xf32>, vector<2x4xf32> -> vector<2x4xf32>
    %cst_6 = arith.constant 0.000000e+00 : f32
    %6 = vector.broadcast %cst_6 : f32 to vector<2x4xf32>
    %7 = arith.maximumf %5, %6 : vector<2x4xf32>
    %c0_7 = arith.constant 0 : index
    %c0_8 = arith.constant 0 : index
    %8 = vector.load %arg3[%c0_7, %c0_8] : memref<4x4xf32, #tpu.memory_space<vmem>>, vector<4x4xf32>
    %cst_9 = arith.constant dense<0.000000e+00> : vector<2x4xf32>
    %9 = tpu.matmul %7, %8, %cst_9 {dimension_numbers = #tpu.dot_dimension_numbers<[1], [0], [0], [1], [0, 0, 1, 1], [], []>} : vector<2x4xf32>, vector<4x4xf32>, vector<2x4xf32> -> vector<2x4xf32>
    %10 = arith.negf %9 : vector<2x4xf32>
    %11 = math.exp %10 : vector<2x4xf32>
    %cst_10 = arith.constant 1.000000e+00 : f32
    %12 = vector.broadcast %cst_10 : f32 to vector<2x4xf32>
    %13 = arith.addf %12, %11 : vector<2x4xf32>
    %14 = arith.divf %12, %13 : vector<2x4xf32>
    %15 = vector.shape_cast %14 : vector<2x4xf32> to vector<2x4x1xf32>
    %16 = vector.broadcast %15 : vector<2x4x1xf32> to vector<2x4x256xf32>
    %17 = arith.mulf %0, %16 : vector<2x4x256xf32>
    %c0_11 = arith.constant 0 : index
    %c0_12 = arith.constant 0 : index
    %c0_13 = arith.constant 0 : index
    %18 = vector.load %arg4[%c0_11, %c0_12, %c0_13] : memref<2x4x256xf32, #tpu.memory_space<vmem>>, vector<2x4x256xf32>
    tpu.vector_store %arg4[%c0_11, %c0_12, %c0_13], %17 {strides = array<i32>} : memref<2x4x256xf32, #tpu.memory_space<vmem>>, vector<2x4x256xf32>,
    return
  }
  func.func @transform_0(%arg0: i32) -> (i32, i32, i32) {
    %c0_i32 = arith.constant 0 : i32
    %c0_i32_0 = arith.constant 0 : i32
    %c0_i32_1 = arith.constant 0 : i32
    return %arg0, %c0_i32, %c0_i32_0 : i32, i32, i32
  }
  func.func @transform_1(%arg0: i32) -> (i32, i32) {
    %c0_i32 = arith.constant 0 : i32
    %c0_i32_0 = arith.constant 0 : i32
    %c0_i32_1 = arith.constant 0 : i32
    return %c0_i32, %c0_i32_0 : i32, i32
  }
  func.func @transform_2(%arg0: i32) -> (i32, i32) {
    %c0_i32 = arith.constant 0 : i32
    %c0_i32_0 = arith.constant 0 : i32
    %c0_i32_1 = arith.constant 0 : i32
    return %c0_i32, %c0_i32_0 : i32, i32
  }
  func.func @transform_3(%arg0: i32) -> (i32, i32, i32) {
    %c0_i32 = arith.constant 0 : i32
    %c0_i32_0 = arith.constant 0 : i32
    %c0_i32_1 = arith.constant 0 : i32
    return %arg0, %c0_i32, %c0_i32_0 : i32, i32, i32
  }
}

</mosaic_0001>

<llo_original>
// kernel: tpu_custom_call.1
$region0: #{tpu_custom_call.1}
  #allocation0 [shape = 'u32[]', space=smem, size = 0x4, offset = 0x4, fixed_abs, tag = 'smem constant byte address 0x4 - core index']
  #allocation1 [shape = 'u32[144,128]{1,0:T(1,128)}', space=vmem, size = 0x12000, scoped, tag = 'internal scratch']
  %s0 = inlined_call_operand.hbm [shape: f32[2,4,256], index: 0, kind: input, shape index: {}]
  %s1 = inlined_call_operand.hbm [shape: f32[4,4], index: 1, kind: input, shape index: {}]
  %s2 = inlined_call_operand.vmem [shape: f32[4,4], index: 2, kind: input, shape index: {}]
  %s3 = inlined_call_operand.hbm [shape: f32[2,4,256], index: 3, kind: output, shape index: {}]
  %s4 = sld [smem:[#allocation0]]
  $region30: #{tpu_custom_call.1} parent=0
    _
  %s6 = ssub.s32 1, %s4
  %s7 = scalar_select 0, %s6, %s4
  $region1: #{tpu_custom_call.1} parent=0
    #allocation2 [shape = 'u8[8192]{0}', space=vmem, size = 0x2000, scoped, tag = 'input window, operand 0, single buffered']
    #allocation3 [shape = 's32[1]{0}', space=sflag, size = 0x4, scoped, tag = 'scoped memory for tpu_custom_call.1']
    #allocation4 [shape = 's32[1]{0}', space=sflag, size = 0x4, scoped, tag = 'scoped memory for tpu_custom_call.1']
    #allocation5 [shape = 'u8[2048]{0}', space=vmem, size = 0x800, scoped, tag = 'input window, operand 1, single buffered']
    #allocation6 [shape = 's32[1]{0}', space=sflag, size = 0x4, scoped, tag = 'scoped memory for tpu_custom_call.1']
    #allocation7 [shape = 'u8[8192]{0}', space=vmem, size = 0x2000, scoped, tag = 'output window, operand 0, single buffered']
    %8 = vsyncpa [#allocation3], 0
    %9 = vsyncpa [#allocation6], 0
    %10 = vsyncpa [#allocation4], 0
    // Predicated region
    $region2: #{tpu_custom_call.1} parent=1 // pred_check
      _
    $region3: #{tpu_custom_call.1} parent=1 // pred_check_branch
      %12 = sbr.rel (0) target = $region5
    $region4: #{tpu_custom_call.1} parent=1 // pred_region
      %s14 = ssub.s32 256, 256
      %15 = vsyncadd [#allocation3], %s14
      %s16 = sshll.u32 [#allocation2], 4
      %s17 = int_to_ptr.vmem [resolvable:$true] %s16
      %22 = dma.hbm_to_vmem [thread:$0]  %s0, 256, %s17, [#allocation3], 128, 128, 8
    $region5: #{tpu_custom_call.1} parent=1 // pred_fallthru
      _
    // Predicated region
    $region6: #{tpu_custom_call.1} parent=1 // pred_check
      _
    $region7: #{tpu_custom_call.1} parent=1 // pred_check_branch
      %24 = sbr.rel (0) target = $region9
    $region8: #{tpu_custom_call.1} parent=1 // pred_region
      %s26 = ssub.s32 64, 64
      %27 = vsyncadd [#allocation6], %s26
      %s29 = sshll.u32 [#allocation5], 4
      %s30 = int_to_ptr.vmem [resolvable:$true] %s29
      %32 = dma.hbm_to_vmem [thread:$0]  %s1, 64, %s30, [#allocation6]
    $region9: #{tpu_custom_call.1} parent=1 // pred_fallthru
      _
    // Predicated region
    $region10: #{tpu_custom_call.1} parent=1 // pred_check
      _
    $region11: #{tpu_custom_call.1} parent=1 // pred_check_branch
      %34 = sbr.rel (0) target = $region13
    $region12: #{tpu_custom_call.1} parent=1 // pred_region
      _
    $region13: #{tpu_custom_call.1} parent=1 // pred_fallthru
      _
    // Predicated region
    $region14: #{tpu_custom_call.1} parent=1 // pred_check
      _
    $region15: #{tpu_custom_call.1} parent=1 // pred_check_branch
      %36 = sbr.rel (0) target = $region17
    $region16: #{tpu_custom_call.1} parent=1 // pred_region
      %37 = dma.done [#allocation3], 256
    $region17: #{tpu_custom_call.1} parent=1 // pred_fallthru
      _
    // Predicated region
    $region18: #{tpu_custom_call.1} parent=1 // pred_check
      _
    $region19: #{tpu_custom_call.1} parent=1 // pred_check_branch
      %39 = sbr.rel (0) target = $region21
    $region20: #{tpu_custom_call.1} parent=1 // pred_region
      %40 = dma.done [#allocation6], 64
    $region21: #{tpu_custom_call.1} parent=1 // pred_fallthru
      _
    %v41 = vld [vmem:[#allocation2] sm:$0xff]
    %v42 = vld [vmem:[#allocation2 + $0x8] sm:$0xff]
    %v45 = vcombine.high %v41, %v41
    %v46 = vcombine.high %v42, %v42
    %vm49 = vcmask 1043456
    %v50 = vsel %vm49, %v41, 0.0
    %v51 = vsel %vm49, %v45, 0.0
    %v52 = vadd.f32 %v50, %v51
    %53 = vadd.xlane.f32.xlu0 %v52
    %v54 = vpop.xlane.xlu0 %53
    %v55 = vsel %vm49, %v42, 0.0
    %v56 = vsel %vm49, %v46, 0.0
    %v57 = vadd.f32 %v55, %v56
    %58 = vadd.xlane.f32.xlu0 %v57
    %v59 = vpop.xlane.xlu0 %58
    %v60 = vrcp.pop 256.0
    %v61 = vmul.f32 %v54, %v60
    %v62 = vmul.f32 %v59, %v60
    %v63 = vld [vmem:[#allocation5] sm:$0xf]
    %v66 = vlaneseq
    %v67 = vand.u32 %v66, 127
    %v68 = vlaneseq
    %v69 = vshrl.u32 %v68, 7
    %v70 = vsub.s32 %v67, %v69
    %v71 = vrot.slane %v61, %v70
    %v72 = vlaneseq
    %v73 = vshrl.u32 %v72, 7
    %v74 = vsub.s32 %v67, %v73
    %v75 = vrot.slane %v62, %v74
    %vm76 = vcmask 1041409
    %v77 = vsel %vm76, %v75, %v71
    %vm78 = vcmask 31744
    %v79 = vsel %vm78, %v77, 0
    %v82 = vsel %vm49, %v63, 0
    %84 = vmatprep.subr.mxu0 0.0
    %85 = vmatpush1.msra.mxu0 %v82
    %86 = vmatprep.subr.mxu0 0.0
    %87 = vmatpush1.msra.mxu0 0.0
    %88 = vmatprep.subr.mxu0 0.0
    %89 = vmatpush1.msra.mxu0 0.0
    %90 = vmatprep.subr.mxu0 0.0
    %91 = vmatpush1.msra.mxu0 0.0
    %92 = vmatprep.subr.mxu0 0.0
    %93 = vmatpush1.msra.mxu0 0.0
    %94 = vmatprep.subr.mxu0 0.0
    %95 = vmatpush1.msra.mxu0 0.0
    %96 = vmatprep.subr.mxu0 0.0
    %97 = vmatpush1.msra.mxu0 0.0
    %98 = vmatprep.subr.mxu0 0.0
    %99 = vmatpush1.msra.mxu0 0.0
    %100 = vmatprep.subr.mxu0 0.0
    %101 = vmatpush1.msra.mxu0 0.0
    %102 = vmatprep.subr.mxu0 0.0
    %103 = vmatpush1.msra.mxu0 0.0
    %104 = vmatprep.subr.mxu0 0.0
    %105 = vmatpush1.msra.mxu0 0.0
    %106 = vmatprep.subr.mxu0 0.0
    %107 = vmatpush1.msra.mxu0 0.0
    %108 = vmatprep.subr.mxu0 0.0
    %109 = vmatpush1.msra.mxu0 0.0
    %110 = vmatprep.subr.mxu0 0.0
    %111 = vmatpush1.msra.mxu0 0.0
    %112 = vmatprep.subr.mxu0 0.0
    %113 = vmatpush1.msra.mxu0 0.0
    %114 = vmatprep.subr.mxu0 0.0
    %115 = vmatpush1.msra.mxu0 0.0
    %116 = vmatprep.subr.mxu0 0.0
    %117 = vmatpush1.msra.mxu0 0.0
    %118 = vmatprep.subr.mxu0 0.0
    %119 = vmatpush1.msra.mxu0 0.0
    %120 = vmatprep.subr.mxu0 0.0
    %121 = vmatpush1.msra.mxu0 0.0
    %122 = vmatprep.subr.mxu0 0.0
    %123 = vmatpush1.msra.mxu0 0.0
    %124 = vmatprep.subr.mxu0 0.0
    %125 = vmatpush1.msra.mxu0 0.0
    %126 = vmatprep.subr.mxu0 0.0
    %127 = vmatpush1.msra.mxu0 0.0
    %128 = vmatprep.subr.mxu0 0.0
    %129 = vmatpush1.msra.mxu0 0.0
    %130 = vmatprep.subr.mxu0 0.0
    %131 = vmatpush1.msra.mxu0 0.0
    %132 = vmatprep.subr.mxu0 0.0
    %133 = vmatpush1.msra.mxu0 0.0
    %134 = vmatprep.subr.mxu0 0.0
    %135 = vmatpush1.msra.mxu0 0.0
    %136 = vmatprep.subr.mxu0 0.0
    %137 = vmatpush1.msra.mxu0 0.0
    %138 = vmatprep.subr.mxu0 0.0
    %139 = vmatpush1.msra.mxu0 0.0
    %140 = vmatprep.subr.mxu0 0.0
    %141 = vmatpush1.msra.mxu0 0.0
    %142 = vmatprep.subr.mxu0 0.0
    %143 = vmatpush1.msra.mxu0 0.0
    %144 = vmatprep.subr.mxu0 0.0
    %145 = vmatpush1.msra.mxu0 0.0
    %146 = vmatprep.subr.mxu0 0.0
    %147 = vmatpush1.msra.mxu0 0.0
    %148 = vmatprep.mubr.f32.mxu0 0.0
    %149 = vmatmul.mubr.f32.gmra.mrb[0].mxu0 %v79
    %v150 = vpop.f32.mrb[0].mxu0
    %v151 = vadd.f32 0.0, %v150
    %v152 = vpop.f32.mrb[0].mxu0
    %153 = vdwg.mxu0
    %v154 = vmax.f32 %v151, 0.0
    %v155 = vld [vmem:[%s2] sm:$0xf]
    %v157 = vsel %vm78, %v154, 0
    %v160 = vsel %vm49, %v155, 0
    %162 = vmatprep.subr.mxu0 0.0
    %163 = vmatpush1.msra.mxu0 %v160
    %164 = vmatprep.subr.mxu0 0.0
    %165 = vmatpush1.msra.mxu0 0.0
    %166 = vmatprep.subr.mxu0 0.0
    %167 = vmatpush1.msra.mxu0 0.0
    %168 = vmatprep.subr.mxu0 0.0
    %169 = vmatpush1.msra.mxu0 0.0
    %170 = vmatprep.subr.mxu0 0.0
    %171 = vmatpush1.msra.mxu0 0.0
    %172 = vmatprep.subr.mxu0 0.0
    %173 = vmatpush1.msra.mxu0 0.0
    %174 = vmatprep.subr.mxu0 0.0
    %175 = vmatpush1.msra.mxu0 0.0
    %176 = vmatprep.subr.mxu0 0.0
    %177 = vmatpush1.msra.mxu0 0.0
    %178 = vmatprep.subr.mxu0 0.0
    %179 = vmatpush1.msra.mxu0 0.0
    %180 = vmatprep.subr.mxu0 0.0
    %181 = vmatpush1.msra.mxu0 0.0
    %182 = vmatprep.subr.mxu0 0.0
    %183 = vmatpush1.msra.mxu0 0.0
    %184 = vmatprep.subr.mxu0 0.0
    %185 = vmatpush1.msra.mxu0 0.0
    %186 = vmatprep.subr.mxu0 0.0
    %187 = vmatpush1.msra.mxu0 0.0
    %188 = vmatprep.subr.mxu0 0.0
    %189 = vmatpush1.msra.mxu0 0.0
    %190 = vmatprep.subr.mxu0 0.0
    %191 = vmatpush1.msra.mxu0 0.0
    %192 = vmatprep.subr.mxu0 0.0
    %193 = vmatpush1.msra.mxu0 0.0
    %194 = vmatprep.subr.mxu0 0.0
    %195 = vmatpush1.msra.mxu0 0.0
    %196 = vmatprep.subr.mxu0 0.0
    %197 = vmatpush1.msra.mxu0 0.0
    %198 = vmatprep.subr.mxu0 0.0
    %199 = vmatpush1.msra.mxu0 0.0
    %200 = vmatprep.subr.mxu0 0.0
    %201 = vmatpush1.msra.mxu0 0.0
    %202 = vmatprep.subr.mxu0 0.0
    %203 = vmatpush1.msra.mxu0 0.0
    %204 = vmatprep.subr.mxu0 0.0
    %205 = vmatpush1.msra.mxu0 0.0
    %206 = vmatprep.subr.mxu0 0.0
    %207 = vmatpush1.msra.mxu0 0.0
    %208 = vmatprep.subr.mxu0 0.0
    %209 = vmatpush1.msra.mxu0 0.0
    %210 = vmatprep.subr.mxu0 0.0
    %211 = vmatpush1.msra.mxu0 0.0
    %212 = vmatprep.subr.mxu0 0.0
    %213 = vmatpush1.msra.mxu0 0.0
    %214 = vmatprep.subr.mxu0 0.0
    %215 = vmatpush1.msra.mxu0 0.0
    %216 = vmatprep.subr.mxu0 0.0
    %217 = vmatpush1.msra.mxu0 0.0
    %218 = vmatprep.subr.mxu0 0.0
    %219 = vmatpush1.msra.mxu0 0.0
    %220 = vmatprep.subr.mxu0 0.0
    %221 = vmatpush1.msra.mxu0 0.0
    %222 = vmatprep.subr.mxu0 0.0
    %223 = vmatpush1.msra.mxu0 0.0
    %224 = vmatprep.subr.mxu0 0.0
    %225 = vmatpush1.msra.mxu0 0.0
    %226 = vmatprep.mubr.f32.mxu0 0.0
    %227 = vmatmul.mubr.f32.gmra.mrb[0].mxu0 %v157
    %v228 = vpop.f32.mrb[0].mxu0
    %v229 = vadd.f32 0.0, %v228
    %v230 = vpop.f32.mrb[0].mxu0
    %231 = vdwg.mxu0
    %v232 = vxor.u32 %v229, 2147483648
    %v233 = vmul.f32 %v232, 1.442695
    %v234 = vpow.pop %v233
    %v235 = vadd.f32 %v234, 1.0
    %v236 = vrcp.pop %v235
    %v237 = vmul.f32 1.0, %v236
    %v238 = vlaneseq
    %v239 = vshrl.u32 %v238, 7
    %v240 = vsub.s32 0, %v239
    %v241 = vrot.slane %v237, %v240
    %243 = vbcast.lane.b32.xlu0 %v241, 256
    %v244 = vpop.permute.xlu0 %243
    %v245 = vlaneseq
    %v246 = vshrl.u32 %v245, 7
    %v247 = vsub.s32 1, %v246
    %v248 = vrot.slane %v237, %v247
    %250 = vbcast.lane.b32.xlu0 %v248, 256
    %v251 = vpop.permute.xlu0 %250
    %v255 = vunpack.c.l.s4 839922192
    %v256 = vunpack.c.0.s8 %v255
    %v257 = vlaneseq
    %v258 = vshrl.u32 %v257, 7
    %v259 = vsub.s32 %v256, %v258
    %v260 = vrot.slane %v244, %v259
    %v262 = vunpack.c.l.s4 839922192
    %v263 = vunpack.c.0.s8 %v262
    %v264 = vlaneseq
    %v265 = vshrl.u32 %v264, 7
    %v266 = vsub.s32 %v263, %v265
    %v267 = vrot.slane %v251, %v266
    %v270 = vmul.f32 %v41, %v260
    %v271 = vmul.f32 %v42, %v267
    %272 = vst [vmem:[#allocation7] sm:$0xff] %v270
    %273 = vst [vmem:[#allocation7 + $0x8] sm:$0xff] %v271
    // Predicated region
    $region22: #{tpu_custom_call.1} parent=1 // pred_check
      _
    $region23: #{tpu_custom_call.1} parent=1 // pred_check_branch
      %275 = sbr.rel (0) target = $region25
    $region24: #{tpu_custom_call.1} parent=1 // pred_region
      %s277 = ssub.s32 256, 256
      %278 = vsyncadd [#allocation4], %s277
      %s279 = sshll.u32 [#allocation7], 4
      %s280 = int_to_ptr.vmem [resolvable:$true] %s279
      %285 = dma.vmem_to_hbm [thread:$0]  %s280, 256, %s3, [#allocation4], 128, 128, 8
    $region25: #{tpu_custom_call.1} parent=1 // pred_fallthru
      _
    // Predicated region
    $region26: #{tpu_custom_call.1} parent=1 // pred_check
      _
    $region27: #{tpu_custom_call.1} parent=1 // pred_check_branch
      %287 = sbr.rel (0) target = $region29
    $region28: #{tpu_custom_call.1} parent=1 // pred_region
      %288 = dma.done [#allocation4], 256
    $region29: #{tpu_custom_call.1} parent=1 // pred_fallthru
      _
    %289 = vsyncpa [#allocation3], 1
    %290 = vsyncpa [#allocation6], 1
    %291 = vsyncpa [#allocation4], 1

</llo_original>
